<compile_context>
chip_gen: v5e
topology: v5e:2x2
jax: 0.10.0
libtpu: 0.0.40
codegen_flags: <defaults>
</compile_context>

<pallas_src>
import functools

import jax
import jax.numpy as jnp
from jax import lax
from jax.experimental import pallas as pl
from jax.experimental.pallas import tpu as pltpu

_NEG_BIG = -1e30


def _round_up(x, m):
    return ((x + m - 1) // m) * m


def _clip_loss_kernel(
    img_ref,      # VMEM (TILE_B, D_pad) bf16 : normalized*scale image row block
    txt_ref,      # VMEM (TILE_N, D_pad) bf16 : normalized text column block
    loss_ref,     # VMEM (1, 1) f32 : scalar clip loss (written at last step)
    row_max,      # VMEM (TILE_B, 1) f32 : online row max (current row block)
    row_sum,      # VMEM (TILE_B, 1) f32 : online row sum-exp
    col_max,      # VMEM (NJ, 1, TILE_N) f32 : online column max, all col blocks
    col_sum,      # VMEM (NJ, 1, TILE_N) f32 : online column sum-exp
    acc_rowlse,   # VMEM (1, 1) f32 : sum of row LSEs over valid rows
    acc_collse,   # VMEM (1, 1) f32 : sum of column LSEs over valid columns
    acc_diag,     # VMEM (1, 1) f32 : sum of diagonal logits
    *, b_true, tile_b, tile_n, padded,
):
    i = pl.program_id(0)          # image row block (outer)
    j = pl.program_id(1)          # text column block (inner, streams text tiles)
    ni = pl.num_programs(0)
    nj = pl.num_programs(1)
    neg_big = jnp.float32(_NEG_BIG)

    @pl.when(jnp.logical_and(i == 0, j == 0))
    def _init_global():
        acc_rowlse[...] = jnp.zeros_like(acc_rowlse)
        acc_collse[...] = jnp.zeros_like(acc_collse)
        acc_diag[...] = jnp.zeros_like(acc_diag)

    @pl.when(j == 0)
    def _init_row_state():
        row_max[...] = jnp.full_like(row_max, neg_big)
        row_sum[...] = jnp.zeros_like(row_sum)

    @pl.when(i == 0)
    def _init_col_state():
        col_max[j] = jnp.full((1, tile_n), neg_big, jnp.float32)
        col_sum[j] = jnp.zeros((1, tile_n), jnp.float32)

    # ---- (TILE_B, TILE_N) logits slab on the MXU -----------------------------
    # bf16 operands, f32 accumulation.  NT contraction (contract dim 1 of both
    # operands) is the same form used by the reference TPU flash-attention
    # kernel; Mosaic feeds the MXU without an XLU relayout of the RHS.
    logits = lax.dot_general(
        img_ref[...], txt_ref[...],
        dimension_numbers=(((1,), (1,)), ((), ())),
        preferred_element_type=jnp.float32)

    if padded:
        # Pad columns only exist in the last column block and pad rows only in
        # the last row block; the two biases below are all-zero elsewhere, so
        # these two broadcast adds are the only per-step masking cost (and are
        # skipped entirely at trace time when B is tile-aligned).
        col_g = lax.broadcasted_iota(jnp.int32, (1, tile_n), 1) + j * tile_n
        col_bias = jnp.where(col_g < b_true, 0.0, neg_big)        # (1, TILE_N)
        row_g = lax.broadcasted_iota(jnp.int32, (tile_b, 1), 0) + i * tile_b
        row_valid = row_g < b_true                                 # (TILE_B, 1)
        row_bias = jnp.where(row_valid, 0.0, neg_big)              # (TILE_B, 1)
        logits_r = logits + col_bias   # pad columns removed from row LSE
        logits_c = logits + row_bias   # pad rows removed from column LSE
    else:
        logits_r = logits
        logits_c = logits

    # ---- image-side: online row logsumexp across column blocks ---------------
    blk_rmax = jnp.max(logits_r, axis=-1, keepdims=True)           # (TILE_B, 1)
    new_rmax = jnp.maximum(row_max[...], blk_rmax)
    row_sum[...] = (row_sum[...] * jnp.exp(row_max[...] - new_rmax)
                    + jnp.sum(jnp.exp(logits_r - new_rmax), axis=-1,
                              keepdims=True))
    row_max[...] = new_rmax

    # ---- text-side: online column logsumexp across row blocks (XLU reduces) --
    cm = col_max[j]                                                 # (1, TILE_N)
    cs = col_sum[j]
    blk_cmax = jnp.max(logits_c, axis=0, keepdims=True)
    new_cmax = jnp.maximum(cm, blk_cmax)
    col_sum[j] = (cs * jnp.exp(cm - new_cmax)
                  + jnp.sum(jnp.exp(logits_c - new_cmax), axis=0, keepdims=True))
    col_max[j] = new_cmax

    # ---- diagonal term: read from the same bf16-derived logits slab ----------
    # tile_n % tile_b == 0, so the diagonal band of row block i lies entirely in
    # column block j == (i * tile_b) // tile_n; this body runs once per row blk.
    diag_hit = jnp.logical_and(j * tile_n <= i * tile_b,
                               i * tile_b < (j + 1) * tile_n)

    @pl.when(diag_hit)
    def _diag():
        rg = lax.broadcasted_iota(jnp.int32, (tile_b, tile_n), 0) + i * tile_b
        cg = lax.broadcasted_iota(jnp.int32, (tile_b, tile_n), 1) + j * tile_n
        d = jnp.sum(jnp.where(rg == cg, logits, 0.0), axis=-1, keepdims=True)
        if padded:
            d = jnp.where(row_valid, d, 0.0)
        acc_diag[...] += jnp.sum(d, axis=0, keepdims=True)

    # ---- per-row-block finalize (last column block) ---------------------------
    @pl.when(j == nj - 1)
    def _finalize_rows():
        row_lse = row_max[...] + jnp.log(row_sum[...])              # (TILE_B, 1)
        if padded:
            row_lse = jnp.where(row_valid, row_lse, 0.0)
        acc_rowlse[...] += jnp.sum(row_lse, axis=0, keepdims=True)

    # ---- per-column-block finalize (last row block) ---------------------------
    @pl.when(i == ni - 1)
    def _finalize_cols():
        col_lse = col_max[j] + jnp.log(col_sum[j])                  # (1, TILE_N)
        if padded:
            col_lse = jnp.where(col_g < b_true, col_lse, 0.0)
        acc_collse[...] += jnp.sum(col_lse, axis=1, keepdims=True)

    # ---- global finalize ------------------------------------------------------
    @pl.when(jnp.logical_and(i == ni - 1, j == nj - 1))
    def _finalize():
        inv_b = jnp.float32(1.0 / b_true)
        loss_ref[...] = 0.5 * inv_b * (acc_rowlse[...] + acc_collse[...]
                                       - 2.0 * acc_diag[...])       # hard_weight=1


def clip_loss(image_embed, text_embed, logit_scale):
    """Returns {'clip_loss': scalar}, matching CLIPLoss.forward (default args)."""
    b, d = image_embed.shape

    # --- tiny XLA pre-pass: L2-normalize both sides, fold logit_scale into the
    # image operand, cast to bf16 MXU operands (per perf review).
    def _l2n(x):
        x = x.astype(jnp.float32)
        inv = lax.rsqrt(jnp.maximum(jnp.sum(x * x, axis=-1, keepdims=True), 1e-24))
        return x * inv

    scale = jnp.asarray(logit_scale, jnp.float32)
    img_n = (_l2n(image_embed) * scale).astype(jnp.bfloat16)
    txt_n = _l2n(text_embed).astype(jnp.bfloat16)

    # --- tile selection (tile_n is always a multiple of tile_b) ----------------
    d_pad = _round_up(d, 128)
    if b <= 256:
        tile_b = tile_n = _round_up(b, 16)       # 16: bf16 sublane packing
    elif b <= 1024:
        tile_b = 256
        tile_n = _round_up(b, 256)               # single column block
    else:
        tile_b, tile_n = 256, 512                # flash-style: VMEM independent of B
    b_pad = _round_up(b, tile_n)                 # multiple of tile_b and tile_n
    ni = b_pad // tile_b
    nj = b_pad // tile_n
    padded = (b_pad != b)

    def _pad(x):
        return jnp.pad(x, ((0, b_pad - b), (0, d_pad - d)))

    img_p = _pad(img_n)
    txt_p = _pad(txt_n)

    kernel = functools.partial(_clip_loss_kernel, b_true=b, tile_b=tile_b,
                               tile_n=tile_n, padded=padded)

    # Explicit VMEM budget (perf review): double-buffered bf16 input tiles,
    # f32 online-softmax state, plus headroom for the (tile_b, tile_n) f32
    # logits slab and its temporaries.
    vmem_budget = (2 * tile_b * d_pad * 2            # image tile, double-buffered
                   + 2 * tile_n * d_pad * 2          # text tile, double-buffered
                   + 2 * nj * 8 * tile_n * 4         # column LSE state (padded)
                   + 2 * tile_b * 128 * 4            # row LSE state (padded)
                   + 8 * tile_b * tile_n * 4         # logits slab + temporaries
                   + (2 << 20))                      # slack
    vmem_limit = int(min(96 * 1024 * 1024, max(32 * 1024 * 1024, vmem_budget)))

    loss = pl.pallas_call(
        kernel,
        out_shape=jax.ShapeDtypeStruct((1, 1), jnp.float32),
        grid_spec=pltpu.PrefetchScalarGridSpec(
            num_scalar_prefetch=0,
            grid=(ni, nj),       # j (text column tiles) is the inner, streamed axis
            in_specs=[
                pl.BlockSpec((tile_b, d_pad), lambda i, j: (i, 0)),  # image rows
                pl.BlockSpec((tile_n, d_pad), lambda i, j: (j, 0)),  # text cols
            ],
            out_specs=pl.BlockSpec((1, 1), lambda i, j: (0, 0)),
            scratch_shapes=[
                pltpu.VMEM((tile_b, 1), jnp.float32),        # online row max
                pltpu.VMEM((tile_b, 1), jnp.float32),        # online row sum-exp
                pltpu.VMEM((nj, 1, tile_n), jnp.float32),    # online col max
                pltpu.VMEM((nj, 1, tile_n), jnp.float32),    # online col sum-exp
                pltpu.VMEM((1, 1), jnp.float32),             # sum of row LSEs
                pltpu.VMEM((1, 1), jnp.float32),             # sum of col LSEs
                pltpu.VMEM((1, 1), jnp.float32),             # sum of diag logits
            ]),
        # Both grid axes carry online-softmax / accumulator state -> sequential.
        compiler_params=pltpu.CompilerParams(
            dimension_semantics=("arbitrary", "arbitrary"),
            vmem_limit_bytes=vmem_limit),
    )(img_p, txt_p)
    return {"clip_loss": loss[0, 0]}


def _clip_loss_ref(image_embed, text_embed, logit_scale):
    # pure-JAX f32 reference for sanity checking
    def norm(x):
        return x / jnp.maximum(jnp.linalg.norm(x, axis=-1, keepdims=True), 1e-12)
    img = norm(image_embed.astype(jnp.float32))
    txt = norm(text_embed.astype(jnp.float32))
    li = logit_scale * img @ txt.T
    lt = logit_scale * txt @ img.T
    labels = jnp.arange(img.shape[0])

    def ce(logits):
        logp = jax.nn.log_softmax(logits, axis=-1)
        return -jnp.mean(logp[jnp.arange(logits.shape[0]), labels])
    return 0.5 * (ce(li) + ce(lt))


if __name__ == "__main__":
    B, D = 8, 32  # small batch / embed dim
    key = jax.random.PRNGKey(0)
    k1, k2 = jax.random.split(key)
    image_embed = jax.random.normal(k1, (B, D), dtype=jnp.float32)
    text_embed = jax.random.normal(k2, (B, D), dtype=jnp.float32)
    logit_scale = jnp.float32(14.285714)  # e.g. exp(learned temp) ~ 1/0.07

    out = clip_loss(image_embed, text_embed, logit_scale)
    loss = jax.block_until_ready(out["clip_loss"])

    ref = _clip_loss_ref(image_embed, text_embed, logit_scale)
    # bf16 MXU operands (f32 accumulation) loosen tolerance vs. the f32 reference.
    assert jnp.allclose(loss, ref, rtol=2e-2, atol=7.5e-2), (loss, ref)
    print("KERNEL_OK")
</pallas_src>

<mosaic_0001>
module attributes {stable_mosaic.version = 11 : i64} {
  func.func @_clip_loss_kernel(%arg0: i32, %arg1: i32, %arg2: memref<16x128xbf16, #tpu.memory_space<vmem>>, %arg3: memref<16x128xbf16, #tpu.memory_space<vmem>>, %arg4: memref<1x1xf32, #tpu.memory_space<vmem>>, %arg5: memref<16x1xf32, #tpu.memory_space<vmem>>, %arg6: memref<16x1xf32, #tpu.memory_space<vmem>>, %arg7: memref<1x1x16xf32, #tpu.memory_space<vmem>>, %arg8: memref<1x1x16xf32, #tpu.memory_space<vmem>>, %arg9: memref<1x1xf32, #tpu.memory_space<vmem>>, %arg10: memref<1x1xf32, #tpu.memory_space<vmem>>, %arg11: memref<1x1xf32, #tpu.memory_space<vmem>>) attributes {dimension_semantics = [#tpu.dimension_semantics<arbitrary>, #tpu.dimension_semantics<arbitrary>], iteration_bounds = array<i64: 1, 1>, scalar_prefetch = 0 : i64, scratch_operands = 7 : i64, tpu.core_type = #tpu.core_type<tc>, window_params = [{transform_indices = @transform_0, window_bounds = array<i64: 16, 128>}, {transform_indices = @transform_1, window_bounds = array<i64: 16, 128>}, {pipeline_mode = #tpu.pipeline_mode<synchronous>, transform_indices = @transform_2, window_bounds = array<i64: 1, 1>}]} {
    %c0_i32 = arith.constant 0 : i32
    %0 = arith.cmpi eq, %arg0, %c0_i32 : i32
    %c0_i32_0 = arith.constant 0 : i32
    %1 = arith.cmpi eq, %arg1, %c0_i32_0 : i32
    %2 = arith.andi %0, %1 : i1
    %3 = arith.extui %2 : i1 to i32
    %c0_i32_1 = arith.constant 0 : i32
    %4 = arith.cmpi ne, %3, %c0_i32_1 : i32
    scf.if %4 {
      %cst_51 = arith.constant 0.000000e+00 : f32
      %100 = vector.broadcast %cst_51 : f32 to vector<1x1xf32>
      %c0_52 = arith.constant 0 : index
      %c0_53 = arith.constant 0 : index
      %101 = vector.load %arg9[%c0_52, %c0_53] : memref<1x1xf32, #tpu.memory_space<vmem>>, vector<1x1xf32>
      tpu.vector_store %arg9[%c0_52, %c0_53], %100 {strides = array<i32>} : memref<1x1xf32, #tpu.memory_space<vmem>>, vector<1x1xf32>,
      %cst_54 = arith.constant 0.000000e+00 : f32
      %102 = vector.broadcast %cst_54 : f32 to vector<1x1xf32>
      %c0_55 = arith.constant 0 : index
      %c0_56 = arith.constant 0 : index
      %103 = vector.load %arg10[%c0_55, %c0_56] : memref<1x1xf32, #tpu.memory_space<vmem>>, vector<1x1xf32>
      tpu.vector_store %arg10[%c0_55, %c0_56], %102 {strides = array<i32>} : memref<1x1xf32, #tpu.memory_space<vmem>>, vector<1x1xf32>,
      %cst_57 = arith.constant 0.000000e+00 : f32
      %104 = vector.broadcast %cst_57 : f32 to vector<1x1xf32>
      %c0_58 = arith.constant 0 : index
      %c0_59 = arith.constant 0 : index
      %105 = vector.load %arg11[%c0_58, %c0_59] : memref<1x1xf32, #tpu.memory_space<vmem>>, vector<1x1xf32>
      tpu.vector_store %arg11[%c0_58, %c0_59], %104 {strides = array<i32>} : memref<1x1xf32, #tpu.memory_space<vmem>>, vector<1x1xf32>,
    } else {
    }
    %c0_i32_2 = arith.constant 0 : i32
    %5 = arith.cmpi eq, %arg1, %c0_i32_2 : i32
    %6 = arith.extui %5 : i1 to i32
    %cst = arith.constant -1.000000e+30 : f32
    %c0_i32_3 = arith.constant 0 : i32
    %7 = arith.cmpi ne, %6, %c0_i32_3 : i32
    scf.if %7 {
      %100 = vector.broadcast %cst : f32 to vector<16x1xf32>
      %c0_51 = arith.constant 0 : index
      %c0_52 = arith.constant 0 : index
      %101 = vector.load %arg5[%c0_51, %c0_52] : memref<16x1xf32, #tpu.memory_space<vmem>>, vector<16x1xf32>
      tpu.vector_store %arg5[%c0_51, %c0_52], %100 {strides = array<i32>} : memref<16x1xf32, #tpu.memory_space<vmem>>, vector<16x1xf32>,
      %cst_53 = arith.constant 0.000000e+00 : f32
      %102 = vector.broadcast %cst_53 : f32 to vector<16x1xf32>
      %c0_54 = arith.constant 0 : index
      %c0_55 = arith.constant 0 : index
      %103 = vector.load %arg6[%c0_54, %c0_55] : memref<16x1xf32, #tpu.memory_space<vmem>>, vector<16x1xf32>
      tpu.vector_store %arg6[%c0_54, %c0_55], %102 {strides = array<i32>} : memref<16x1xf32, #tpu.memory_space<vmem>>, vector<16x1xf32>,
    } else {
    }
    %c0_i32_4 = arith.constant 0 : i32
    %8 = arith.cmpi eq, %arg0, %c0_i32_4 : i32
    %9 = arith.extui %8 : i1 to i32
    %cst_5 = arith.constant -1.000000e+30 : f32
    %c0_i32_6 = arith.constant 0 : i32
    %10 = arith.cmpi ne, %9, %c0_i32_6 : i32
    scf.if %10 {
      %100 = vector.broadcast %cst_5 : f32 to vector<1x16xf32>
      %101 = arith.index_cast %arg1 : i32 to index
      %c0_51 = arith.constant 0 : index
      %c0_52 = arith.constant 0 : index
      %102 = vector.load %arg7[%101, %c0_51, %c0_52] : memref<1x1x16xf32, #tpu.memory_space<vmem>>, vector<1x1x16xf32>
      %103 = vector.shape_cast %102 : vector<1x1x16xf32> to vector<1x16xf32>
      %104 = vector.shape_cast %100 : vector<1x16xf32> to vector<1x1x16xf32>
      tpu.vector_store %arg7[%101, %c0_51, %c0_52], %104 {strides = array<i32>} : memref<1x1x16xf32, #tpu.memory_space<vmem>>, vector<1x1x16xf32>,
      %cst_53 = arith.constant 0.000000e+00 : f32
      %105 = vector.broadcast %cst_53 : f32 to vector<1x16xf32>
      %106 = arith.index_cast %arg1 : i32 to index
      %c0_54 = arith.constant 0 : index
      %c0_55 = arith.constant 0 : index
      %107 = vector.load %arg8[%106, %c0_54, %c0_55] : memref<1x1x16xf32, #tpu.memory_space<vmem>>, vector<1x1x16xf32>
      %108 = vector.shape_cast %107 : vector<1x1x16xf32> to vector<1x16xf32>
      %109 = vector.shape_cast %105 : vector<1x16xf32> to vector<1x1x16xf32>
      tpu.vector_store %arg8[%106, %c0_54, %c0_55], %109 {strides = array<i32>} : memref<1x1x16xf32, #tpu.memory_space<vmem>>, vector<1x1x16xf32>,
    } else {
    }
    %c0 = arith.constant 0 : index
    %c0_7 = arith.constant 0 : index
    %11 = vector.load %arg2[%c0, %c0_7] : memref<16x128xbf16, #tpu.memory_space<vmem>>, vector<16x128xbf16>
    %c0_8 = arith.constant 0 : index
    %c0_9 = arith.constant 0 : index
    %12 = vector.load %arg3[%c0_8, %c0_9] : memref<16x128xbf16, #tpu.memory_space<vmem>>, vector<16x128xbf16>
    %cst_10 = arith.constant dense<0.000000e+00> : vector<16x16xf32>
    %13 = tpu.matmul %11, %12, %cst_10 {dimension_numbers = #tpu.dot_dimension_numbers<[1], [1], [0], [0], [0, 0, 1, 0], [], []>} : vector<16x128xbf16>, vector<16x128xbf16>, vector<16x16xf32> -> vector<16x16xf32>
    %14 = tpu.iota {dimensions = array<i32: 1>} : vector<1x16xi32>
    %c16_i32 = arith.constant 16 : i32
    %15 = arith.muli %arg1, %c16_i32 : i32
    %16 = vector.broadcast %15 : i32 to vector<1x16xi32>
    %17 = arith.addi %14, %16 : vector<1x16xi32>
    %c8_i32 = arith.constant 8 : i32
    %18 = vector.broadcast %c8_i32 : i32 to vector<1x16xi32>
    %19 = arith.cmpi slt, %17, %18 : vector<1x16xi32>
    %cst_11 = arith.constant 0.000000e+00 : f32
    %cst_12 = arith.constant -1.000000e+30 : f32
    %20 = vector.broadcast %cst_11 : f32 to vector<1x16xf32>
    %21 = vector.broadcast %cst_12 : f32 to vector<1x16xf32>
    %22 = arith.select %19, %20, %21 : vector<1x16xi1>, vector<1x16xf32>
    %23 = tpu.iota {dimensions = array<i32: 0>} : vector<16x1xi32>
    %c16_i32_13 = arith.constant 16 : i32
    %24 = arith.muli %arg0, %c16_i32_13 : i32
    %25 = vector.broadcast %24 : i32 to vector<16x1xi32>
    %26 = arith.addi %23, %25 : vector<16x1xi32>
    %c8_i32_14 = arith.constant 8 : i32
    %27 = vector.broadcast %c8_i32_14 : i32 to vector<16x1xi32>
    %28 = arith.cmpi slt, %26, %27 : vector<16x1xi32>
    %cst_15 = arith.constant 0.000000e+00 : f32
    %cst_16 = arith.constant -1.000000e+30 : f32
    %29 = vector.broadcast %cst_15 : f32 to vector<16x1xf32>
    %30 = vector.broadcast %cst_16 : f32 to vector<16x1xf32>
    %31 = arith.select %28, %29, %30 : vector<16x1xi1>, vector<16x1xf32>
    %32 = vector.broadcast %22 : vector<1x16xf32> to vector<16x16xf32>
    %33 = arith.addf %13, %32 : vector<16x16xf32>
    %34 = vector.broadcast %31 : vector<16x1xf32> to vector<16x16xf32>
    %35 = arith.addf %13, %34 : vector<16x16xf32>
    %cst_17 = arith.constant dense<0xFF800000> : vector<16xf32>
    %36 = vector.multi_reduction <maximumf>, %33, %cst_17 [1] : vector<16x16xf32> to vector<16xf32>
    %37 = vector.shape_cast %36 : vector<16xf32> to vector<16x1xf32>
    %c0_18 = arith.constant 0 : index
    %c0_19 = arith.constant 0 : index
    %38 = vector.load %arg5[%c0_18, %c0_19] : memref<16x1xf32, #tpu.memory_space<vmem>>, vector<16x1xf32>
    %39 = arith.maximumf %38, %37 : vector<16x1xf32>
    %c0_20 = arith.constant 0 : index
    %c0_21 = arith.constant 0 : index
    %40 = vector.load %arg6[%c0_20, %c0_21] : memref<16x1xf32, #tpu.memory_space<vmem>>, vector<16x1xf32>
    %c0_22 = arith.constant 0 : index
    %c0_23 = arith.constant 0 : index
    %41 = vector.load %arg5[%c0_22, %c0_23] : memref<16x1xf32, #tpu.memory_space<vmem>>, vector<16x1xf32>
    %42 = arith.subf %41, %39 : vector<16x1xf32>
    %43 = math.exp %42 : vector<16x1xf32>
    %44 = arith.mulf %40, %43 : vector<16x1xf32>
    %45 = vector.broadcast %39 : vector<16x1xf32> to vector<16x16xf32>
    %46 = arith.subf %33, %45 : vector<16x16xf32>
    %47 = math.exp %46 : vector<16x16xf32>
    %cst_24 = arith.constant dense<0.000000e+00> : vector<16xf32>
    %48 = vector.multi_reduction <add>, %47, %cst_24 [1] : vector<16x16xf32> to vector<16xf32>
    %49 = vector.shape_cast %48 : vector<16xf32> to vector<16x1xf32>
    %50 = arith.addf %44, %49 : vector<16x1xf32>
    %c0_25 = arith.constant 0 : index
    %c0_26 = arith.constant 0 : index
    %51 = vector.load %arg6[%c0_25, %c0_26] : memref<16x1xf32, #tpu.memory_space<vmem>>, vector<16x1xf32>
    tpu.vector_store %arg6[%c0_25, %c0_26], %50 {strides = array<i32>} : memref<16x1xf32, #tpu.memory_space<vmem>>, vector<16x1xf32>,
    %c0_27 = arith.constant 0 : index
    %c0_28 = arith.constant 0 : index
    %52 = vector.load %arg5[%c0_27, %c0_28] : memref<16x1xf32, #tpu.memory_space<vmem>>, vector<16x1xf32>
    tpu.vector_store %arg5[%c0_27, %c0_28], %39 {strides = array<i32>} : memref<16x1xf32, #tpu.memory_space<vmem>>, vector<16x1xf32>,
    %53 = arith.index_cast %arg1 : i32 to index
    %c0_29 = arith.constant 0 : index
    %c0_30 = arith.constant 0 : index
    %54 = vector.load %arg7[%53, %c0_29, %c0_30] : memref<1x1x16xf32, #tpu.memory_space<vmem>>, vector<1x1x16xf32>
    %55 = vector.shape_cast %54 : vector<1x1x16xf32> to vector<1x16xf32>
    %56 = arith.index_cast %arg1 : i32 to index
    %c0_31 = arith.constant 0 : index
    %c0_32 = arith.constant 0 : index
    %57 = vector.load %arg8[%56, %c0_31, %c0_32] : memref<1x1x16xf32, #tpu.memory_space<vmem>>, vector<1x1x16xf32>
    %58 = vector.shape_cast %57 : vector<1x1x16xf32> to vector<1x16xf32>
    %cst_33 = arith.constant dense<0xFF800000> : vector<16xf32>
    %59 = vector.multi_reduction <maximumf>, %35, %cst_33 [0] : vector<16x16xf32> to vector<16xf32>
    %60 = vector.shape_cast %59 : vector<16xf32> to vector<1x16xf32>
    %61 = arith.maximumf %55, %60 : vector<1x16xf32>
    %62 = arith.subf %55, %61 : vector<1x16xf32>
    %63 = math.exp %62 : vector<1x16xf32>
    %64 = arith.mulf %58, %63 : vector<1x16xf32>
    %65 = vector.broadcast %61 : vector<1x16xf32> to vector<16x16xf32>
    %66 = arith.subf %35, %65 : vector<16x16xf32>
    %67 = math.exp %66 : vector<16x16xf32>
    %cst_34 = arith.constant dense<0.000000e+00> : vector<16xf32>
    %68 = vector.multi_reduction <add>, %67, %cst_34 [0] : vector<16x16xf32> to vector<16xf32>
    %69 = vector.shape_cast %68 : vector<16xf32> to vector<1x16xf32>
    %70 = arith.addf %64, %69 : vector<1x16xf32>
    %71 = arith.index_cast %arg1 : i32 to index
    %c0_35 = arith.constant 0 : index
    %c0_36 = arith.constant 0 : index
    %72 = vector.load %arg8[%71, %c0_35, %c0_36] : memref<1x1x16xf32, #tpu.memory_space<vmem>>, vector<1x1x16xf32>
    %73 = vector.shape_cast %72 : vector<1x1x16xf32> to vector<1x16xf32>
    %74 = vector.shape_cast %70 : vector<1x16xf32> to vector<1x1x16xf32>
    tpu.vector_store %arg8[%71, %c0_35, %c0_36], %74 {strides = array<i32>} : memref<1x1x16xf32, #tpu.memory_space<vmem>>, vector<1x1x16xf32>,
    %75 = arith.index_cast %arg1 : i32 to index
    %c0_37 = arith.constant 0 : index
    %c0_38 = arith.constant 0 : index
    %76 = vector.load %arg7[%75, %c0_37, %c0_38] : memref<1x1x16xf32, #tpu.memory_space<vmem>>, vector<1x1x16xf32>
    %77 = vector.shape_cast %76 : vector<1x1x16xf32> to vector<1x16xf32>
    %78 = vector.shape_cast %61 : vector<1x16xf32> to vector<1x1x16xf32>
    tpu.vector_store %arg7[%75, %c0_37, %c0_38], %78 {strides = array<i32>} : memref<1x1x16xf32, #tpu.memory_space<vmem>>, vector<1x1x16xf32>,
    %c16_i32_39 = arith.constant 16 : i32
    %79 = arith.muli %arg1, %c16_i32_39 : i32
    %c16_i32_40 = arith.constant 16 : i32
    %80 = arith.muli %arg0, %c16_i32_40 : i32
    %81 = arith.cmpi sle, %79, %80 : i32
    %c16_i32_41 = arith.constant 16 : i32
    %82 = arith.muli %arg0, %c16_i32_41 : i32
    %c1_i32 = arith.constant 1 : i32
    %83 = arith.addi %arg1, %c1_i32 : i32
    %c16_i32_42 = arith.constant 16 : i32
    %84 = arith.muli %83, %c16_i32_42 : i32
    %85 = arith.cmpi slt, %82, %84 : i32
    %86 = arith.andi %81, %85 : i1
    %87 = arith.extui %86 : i1 to i32
    %c0_i32_43 = arith.constant 0 : i32
    %88 = arith.cmpi ne, %87, %c0_i32_43 : i32
    scf.if %88 {
      %100 = tpu.iota {dimensions = array<i32: 0>} : vector<16x16xi32>
      %c16_i32_51 = arith.constant 16 : i32
      %101 = arith.muli %arg0, %c16_i32_51 : i32
      %102 = vector.broadcast %101 : i32 to vector<16x16xi32>
      %103 = arith.addi %100, %102 : vector<16x16xi32>
      %104 = tpu.iota {dimensions = array<i32: 1>} : vector<16x16xi32>
      %c16_i32_52 = arith.constant 16 : i32
      %105 = arith.muli %arg1, %c16_i32_52 : i32
      %106 = vector.broadcast %105 : i32 to vector<16x16xi32>
      %107 = arith.addi %104, %106 : vector<16x16xi32>
      %108 = arith.cmpi eq, %103, %107 : vector<16x16xi32>
      %cst_53 = arith.constant 0.000000e+00 : f32
      %109 = vector.broadcast %cst_53 : f32 to vector<16x16xf32>
      %110 = arith.select %108, %13, %109 : vector<16x16xi1>, vector<16x16xf32>
      %cst_54 = arith.constant dense<0.000000e+00> : vector<16xf32>
      %111 = vector.multi_reduction <add>, %110, %cst_54 [1] : vector<16x16xf32> to vector<16xf32>
      %112 = vector.shape_cast %111 : vector<16xf32> to vector<16x1xf32>
      %cst_55 = arith.constant 0.000000e+00 : f32
      %113 = vector.broadcast %cst_55 : f32 to vector<16x1xf32>
      %114 = arith.select %28, %112, %113 : vector<16x1xi1>, vector<16x1xf32>
      %c0_56 = arith.constant 0 : index
      %c0_57 = arith.constant 0 : index
      %115 = vector.load %arg11[%c0_56, %c0_57] : memref<1x1xf32, #tpu.memory_space<vmem>>, vector<1x1xf32>
      %cst_58 = arith.constant dense<0.000000e+00> : vector<1xf32>
      %116 = vector.multi_reduction <add>, %114, %cst_58 [0] : vector<16x1xf32> to vector<1xf32>
      %117 = vector.shape_cast %116 : vector<1xf32> to vector<1x1xf32>
      %118 = arith.addf %115, %117 : vector<1x1xf32>
      %c0_59 = arith.constant 0 : index
      %c0_60 = arith.constant 0 : index
      %119 = vector.load %arg11[%c0_59, %c0_60] : memref<1x1xf32, #tpu.memory_space<vmem>>, vector<1x1xf32>
      tpu.vector_store %arg11[%c0_59, %c0_60], %118 {strides = array<i32>} : memref<1x1xf32, #tpu.memory_space<vmem>>, vector<1x1xf32>,
    } else {
    }
    %c0_i32_44 = arith.constant 0 : i32
    %89 = arith.cmpi eq, %arg1, %c0_i32_44 : i32
    %90 = arith.extui %89 : i1 to i32
    %c0_i32_45 = arith.constant 0 : i32
    %91 = arith.cmpi ne, %90, %c0_i32_45 : i32
    scf.if %91 {
      %c0_51 = arith.constant 0 : index
      %c0_52 = arith.constant 0 : index
      %100 = vector.load %arg5[%c0_51, %c0_52] : memref<16x1xf32, #tpu.memory_space<vmem>>, vector<16x1xf32>
      %c0_53 = arith.constant 0 : index
      %c0_54 = arith.constant 0 : index
      %101 = vector.load %arg6[%c0_53, %c0_54] : memref<16x1xf32, #tpu.memory_space<vmem>>, vector<16x1xf32>
      %102 = math.log %101 : vector<16x1xf32>
      %103 = arith.addf %100, %102 : vector<16x1xf32>
      %cst_55 = arith.constant 0.000000e+00 : f32
      %104 = vector.broadcast %cst_55 : f32 to vector<16x1xf32>
      %105 = arith.select %28, %103, %104 : vector<16x1xi1>, vector<16x1xf32>
      %c0_56 = arith.constant 0 : index
      %c0_57 = arith.constant 0 : index
      %106 = vector.load %arg9[%c0_56, %c0_57] : memref<1x1xf32, #tpu.memory_space<vmem>>, vector<1x1xf32>
      %cst_58 = arith.constant dense<0.000000e+00> : vector<1xf32>
      %107 = vector.multi_reduction <add>, %105, %cst_58 [0] : vector<16x1xf32> to vector<1xf32>
      %108 = vector.shape_cast %107 : vector<1xf32> to vector<1x1xf32>
      %109 = arith.addf %106, %108 : vector<1x1xf32>
      %c0_59 = arith.constant 0 : index
      %c0_60 = arith.constant 0 : index
      %110 = vector.load %arg9[%c0_59, %c0_60] : memref<1x1xf32, #tpu.memory_space<vmem>>, vector<1x1xf32>
      tpu.vector_store %arg9[%c0_59, %c0_60], %109 {strides = array<i32>} : memref<1x1xf32, #tpu.memory_space<vmem>>, vector<1x1xf32>,
    } else {
    }
    %c0_i32_46 = arith.constant 0 : i32
    %92 = arith.cmpi eq, %arg0, %c0_i32_46 : i32
    %93 = arith.extui %92 : i1 to i32
    %c0_i32_47 = arith.constant 0 : i32
    %94 = arith.cmpi ne, %93, %c0_i32_47 : i32
    scf.if %94 {
      %100 = arith.index_cast %arg1 : i32 to index
      %c0_51 = arith.constant 0 : index
      %c0_52 = arith.constant 0 : index
      %101 = vector.load %arg7[%100, %c0_51, %c0_52] : memref<1x1x16xf32, #tpu.memory_space<vmem>>, vector<1x1x16xf32>
      %102 = vector.shape_cast %101 : vector<1x1x16xf32> to vector<1x16xf32>
      %103 = arith.index_cast %arg1 : i32 to index
      %c0_53 = arith.constant 0 : index
      %c0_54 = arith.constant 0 : index
      %104 = vector.load %arg8[%103, %c0_53, %c0_54] : memref<1x1x16xf32, #tpu.memory_space<vmem>>, vector<1x1x16xf32>
      %105 = vector.shape_cast %104 : vector<1x1x16xf32> to vector<1x16xf32>
      %106 = math.log %105 : vector<1x16xf32>
      %107 = arith.addf %102, %106 : vector<1x16xf32>
      %c8_i32_55 = arith.constant 8 : i32
      %108 = vector.broadcast %c8_i32_55 : i32 to vector<1x16xi32>
      %109 = arith.cmpi slt, %17, %108 : vector<1x16xi32>
      %cst_56 = arith.constant 0.000000e+00 : f32
      %110 = vector.broadcast %cst_56 : f32 to vector<1x16xf32>
      %111 = arith.select %109, %107, %110 : vector<1x16xi1>, vector<1x16xf32>
      %c0_57 = arith.constant 0 : index
      %c0_58 = arith.constant 0 : index
      %112 = vector.load %arg10[%c0_57, %c0_58] : memref<1x1xf32, #tpu.memory_space<vmem>>, vector<1x1xf32>
      %cst_59 = arith.constant dense<0.000000e+00> : vector<1xf32>
      %113 = vector.multi_reduction <add>, %111, %cst_59 [1] : vector<1x16xf32> to vector<1xf32>
      %114 = vector.shape_cast %113 : vector<1xf32> to vector<1x1xf32>
      %115 = arith.addf %112, %114 : vector<1x1xf32>
      %c0_60 = arith.constant 0 : index
      %c0_61 = arith.constant 0 : index
      %116 = vector.load %arg10[%c0_60, %c0_61] : memref<1x1xf32, #tpu.memory_space<vmem>>, vector<1x1xf32>
      tpu.vector_store %arg10[%c0_60, %c0_61], %115 {strides = array<i32>} : memref<1x1xf32, #tpu.memory_space<vmem>>, vector<1x1xf32>,
    } else {
    }
    %c0_i32_48 = arith.constant 0 : i32
    %95 = arith.cmpi eq, %arg0, %c0_i32_48 : i32
    %c0_i32_49 = arith.constant 0 : i32
    %96 = arith.cmpi eq, %arg1, %c0_i32_49 : i32
    %97 = arith.andi %95, %96 : i1
    %98 = arith.extui %97 : i1 to i32
    %c0_i32_50 = arith.constant 0 : i32
    %99 = arith.cmpi ne, %98, %c0_i32_50 : i32
    scf.if %99 {
      %cst_51 = arith.constant 5.000000e-01 : f32
      %cst_52 = arith.constant 1.250000e-01 : f32
      %100 = arith.mulf %cst_51, %cst_52 : f32
      %c0_53 = arith.constant 0 : index
      %c0_54 = arith.constant 0 : index
      %101 = vector.load %arg9[%c0_53, %c0_54] : memref<1x1xf32, #tpu.memory_space<vmem>>, vector<1x1xf32>
      %c0_55 = arith.constant 0 : index
      %c0_56 = arith.constant 0 : index
      %102 = vector.load %arg10[%c0_55, %c0_56] : memref<1x1xf32, #tpu.memory_space<vmem>>, vector<1x1xf32>
      %103 = arith.addf %101, %102 : vector<1x1xf32>
      %c0_57 = arith.constant 0 : index
      %c0_58 = arith.constant 0 : index
      %104 = vector.load %arg11[%c0_57, %c0_58] : memref<1x1xf32, #tpu.memory_space<vmem>>, vector<1x1xf32>
      %cst_59 = arith.constant 2.000000e+00 : f32
      %105 = vector.broadcast %cst_59 : f32 to vector<1x1xf32>
      %106 = arith.mulf %105, %104 : vector<1x1xf32>
      %107 = arith.subf %103, %106 : vector<1x1xf32>
      %108 = vector.broadcast %100 : f32 to vector<1x1xf32>
      %109 = arith.mulf %108, %107 : vector<1x1xf32>
      %c0_60 = arith.constant 0 : index
      %c0_61 = arith.constant 0 : index
      %110 = vector.load %arg4[%c0_60, %c0_61] : memref<1x1xf32, #tpu.memory_space<vmem>>, vector<1x1xf32>
      tpu.vector_store %arg4[%c0_60, %c0_61], %109 {strides = array<i32>} : memref<1x1xf32, #tpu.memory_space<vmem>>, vector<1x1xf32>,
    } else {
    }
    return
  }
  func.func @transform_0(%arg0: i32, %arg1: i32) -> (i32, i32) {
    %c0_i32 = arith.constant 0 : i32
    %c0_i32_0 = arith.constant 0 : i32
    return %arg0, %c0_i32 : i32, i32
  }
  func.func @transform_1(%arg0: i32, %arg1: i32) -> (i32, i32) {
    %c0_i32 = arith.constant 0 : i32
    %c0_i32_0 = arith.constant 0 : i32
    return %arg1, %c0_i32 : i32, i32
  }
  func.func @transform_2(%arg0: i32, %arg1: i32) -> (i32, i32) {
    %c0_i32 = arith.constant 0 : i32
    %c0_i32_0 = arith.constant 0 : i32
    %c0_i32_1 = arith.constant 0 : i32
    return %c0_i32, %c0_i32_0 : i32, i32
  }
}

</mosaic_0001>

<llo_original>
// kernel: tpu_custom_call.1
$region0: #{tpu_custom_call.1}
  #allocation0 [shape = 'u32[]', space=smem, size = 0x4, offset = 0x4, fixed_abs, tag = 'smem constant byte address 0x4 - core index']
  #allocation1 [shape = 'u32[72,128]{1,0:T(1,128)}', space=vmem, size = 0x9000, scoped, tag = 'internal scratch']
  #allocation2 [shape = 'f32[16,1]{1,0:T(8,128)}', space=vmem, size = 0x2000, scoped, tag = 'scratch operand']
  #allocation3 [shape = 'f32[16,1]{1,0:T(8,128)}', space=vmem, size = 0x2000, scoped, tag = 'scratch operand']
  #allocation4 [shape = 'f32[1,1,16]{2,1,0:T(1,128)}', space=vmem, size = 0x200, scoped, tag = 'scratch operand']
  #allocation5 [shape = 'f32[1,1,16]{2,1,0:T(1,128)}', space=vmem, size = 0x200, scoped, tag = 'scratch operand']
  #allocation6 [shape = 'f32[1,1]{1,0:T(1,128)}', space=vmem, size = 0x200, scoped, tag = 'scratch operand']
  #allocation7 [shape = 'f32[1,1]{1,0:T(1,128)}', space=vmem, size = 0x200, scoped, tag = 'scratch operand']
  #allocation8 [shape = 'f32[1,1]{1,0:T(1,128)}', space=vmem, size = 0x200, scoped, tag = 'scratch operand']
  %s0 = inlined_call_operand.hbm [shape: bf16[16,128], index: 0, kind: input, shape index: {}]
  %s1 = inlined_call_operand.hbm [shape: bf16[16,128], index: 1, kind: input, shape index: {}]
  %s2 = inlined_call_operand.hbm [shape: f32[1,1], index: 2, kind: output, shape index: {}]
  %s3 = sld [smem:[#allocation0]]
  $region54: #{tpu_custom_call.1} parent=0
    _
  %s5 = ssub.s32 1, %s3
  %s6 = scalar_select 0, %s5, %s3
  $region1: #{tpu_custom_call.1} parent=0
    #allocation9 [shape = 'u8[4096]{0}', space=vmem, size = 0x1000, scoped, tag = 'input window, operand 0, single buffered']
    #allocation10 [shape = 's32[1]{0}', space=sflag, size = 0x4, scoped, tag = 'scoped memory for tpu_custom_call.1']
    #allocation11 [shape = 's32[1]{0}', space=sflag, size = 0x4, scoped, tag = 'scoped memory for tpu_custom_call.1']
    #allocation12 [shape = 'u8[4096]{0}', space=vmem, size = 0x1000, scoped, tag = 'input window, operand 1, single buffered']
    #allocation13 [shape = 's32[1]{0}', space=sflag, size = 0x4, scoped, tag = 'scoped memory for tpu_custom_call.1']
    #allocation14 [shape = 'u8[512]{0}', space=vmem, size = 0x400, scoped, tag = 'output window, operand 0, single buffered']
    %7 = vsyncpa [#allocation10], 0
    %8 = vsyncpa [#allocation13], 0
    %9 = vsyncpa [#allocation11], 0
    // Predicated region
    $region2: #{tpu_custom_call.1} parent=1 // pred_check
      _
    $region3: #{tpu_custom_call.1} parent=1 // pred_check_branch
      %11 = sbr.rel (0) target = $region5
    $region4: #{tpu_custom_call.1} parent=1 // pred_region
      %13 = vsyncadd [#allocation10], 0
      %s14 = sshll.u32 %s0, 4
      %s15 = int_to_ptr.hbm [resolvable:$true] %s14
      %s16 = sshll.u32 [#allocation9], 4
      %s17 = int_to_ptr.vmem [resolvable:$true] %s16
      %22 = dma.hbm_to_vmem [thread:$0]  %s15, 128, %s17, [#allocation10], 64, 64, 4
    $region5: #{tpu_custom_call.1} parent=1 // pred_fallthru
      _
    // Predicated region
    $region6: #{tpu_custom_call.1} parent=1 // pred_check
      _
    $region7: #{tpu_custom_call.1} parent=1 // pred_check_branch
      %24 = sbr.rel (0) target = $region9
    $region8: #{tpu_custom_call.1} parent=1 // pred_region
      %26 = vsyncadd [#allocation13], 0
      %s27 = sshll.u32 %s1, 4
      %s28 = int_to_ptr.hbm [resolvable:$true] %s27
      %s29 = sshll.u32 [#allocation12], 4
      %s30 = int_to_ptr.vmem [resolvable:$true] %s29
      %35 = dma.hbm_to_vmem [thread:$0]  %s28, 128, %s30, [#allocation13], 64, 64, 4
    $region9: #{tpu_custom_call.1} parent=1 // pred_fallthru
      _
    // Predicated region
    $region10: #{tpu_custom_call.1} parent=1 // pred_check
      _
    $region11: #{tpu_custom_call.1} parent=1 // pred_check_branch
      %37 = sbr.rel (0) target = $region13
    $region12: #{tpu_custom_call.1} parent=1 // pred_region
      %39 = dma.done [#allocation10], 128
    $region13: #{tpu_custom_call.1} parent=1 // pred_fallthru
      _
    // Predicated region
    $region14: #{tpu_custom_call.1} parent=1 // pred_check
      _
    $region15: #{tpu_custom_call.1} parent=1 // pred_check_branch
      %41 = sbr.rel (0) target = $region17
    $region16: #{tpu_custom_call.1} parent=1 // pred_region
      %43 = dma.done [#allocation13], 128
    $region17: #{tpu_custom_call.1} parent=1 // pred_fallthru
      _
    %p45 = scmp.eq.s32.totalorder 0, 0
    %p46 = scmp.eq.s32.totalorder 0, 0
    %p47 = pnand %p45, %p46
    %p48 = pneg %p47
    // Predicated region
    $region18: #{tpu_custom_call.1} parent=1 // pred_check
      _
    $region19: #{tpu_custom_call.1} parent=1 // pred_check_branch
      %50 = sbr.rel (%p47) target = $region21
    $region20: #{tpu_custom_call.1} parent=1 // pred_region
      %vm51 = vcmask 0
      %52 = vst.msk [vmem:[#allocation6] sm:$0x1] %vm51, 0.0
      %53 = vst.msk [vmem:[#allocation7] sm:$0x1] %vm51, 0.0
      %54 = vst.msk [vmem:[#allocation8] sm:$0x1] %vm51, 0.0
    $region21: #{tpu_custom_call.1} parent=1 // pred_fallthru
      _
    // Predicated region
    $region22: #{tpu_custom_call.1} parent=1 // pred_check
      %p55 = pneg %p46
    $region23: #{tpu_custom_call.1} parent=1 // pred_check_branch
      %57 = sbr.rel (%p55) target = $region25
    $region24: #{tpu_custom_call.1} parent=1 // pred_region
      %vm58 = vcmask 7168
      %59 = vst.msk [vmem:[#allocation2] sm:$0xff] %vm58, -1e+30
      %60 = vst.msk [vmem:[#allocation2 + $0x8] sm:$0xff] %vm58, -1e+30
      %61 = vst.msk [vmem:[#allocation3] sm:$0xff] %vm58, 0.0
      %62 = vst.msk [vmem:[#allocation3 + $0x8] sm:$0xff] %vm58, 0.0
    $region25: #{tpu_custom_call.1} parent=1 // pred_fallthru
      _
    // Predicated region
    $region26: #{tpu_custom_call.1} parent=1 // pred_check
      %p63 = pneg %p45
    $region27: #{tpu_custom_call.1} parent=1 // pred_check_branch
      %65 = sbr.rel (%p63) target = $region29
    $region28: #{tpu_custom_call.1} parent=1 // pred_region
      %vm66 = vcmask 122880
      %67 = vst.msk [vmem:[#allocation4] sm:$0x1] %vm66, -1e+30
      %68 = vst.msk [vmem:[#allocation5] sm:$0x1] %vm66, 0.0
    $region29: #{tpu_custom_call.1} parent=1 // pred_fallthru
      _
    %v69 = vld [vmem:[#allocation9] sm:$0xf]
    %v70 = vld [vmem:[#allocation9 + $0x4] sm:$0xf]
    %v71 = vld [vmem:[#allocation12] sm:$0xf]
    %v72 = vld [vmem:[#allocation12 + $0x4] sm:$0xf]
    %v75 = vunpack.c.l.b16 %v69
    %v76 = vunpack.c.l.b16 %v70
    %v77 = vpack.c.b16 %v76, %v75
    %v81 = vunpack.c.l.b16 %v71
    %v82 = vunpack.c.l.b16 %v72
    %v83 = vpack.c.b16 %v82, %v81
    %85 = vmatpush.bf16.xpose.msra.mxu0 0
    %86 = vmatpush.bf16.xpose.msra.mxu0 0
    %87 = vmatpush.bf16.xpose.msra.mxu0 0
    %88 = vmatpush.bf16.xpose.msra.mxu0 0
    %89 = vmatpush.bf16.xpose.msra.mxu0 0
    %90 = vmatpush.bf16.xpose.msra.mxu0 0
    %91 = vmatpush.bf16.xpose.msra.mxu0 0
    %92 = vmatpush.bf16.xpose.msra.mxu0 %v83
    %93 = vmatmul.bf16.gmra.mxu0 %v77
    %v94 = vpop.f32.mrf.mxu0
    %v95 = vadd.f32 0.0, %v94
    %v96 = vpop.f32.mrf.mxu0
    %v97 = vadd.f32 0.0, %v96
    %98 = vdwg.mxu0
    %v99 = vlaneseq
    %v100 = vand.u32 %v99, 127
    %s101 = smul.u32 0, 16
    %v102 = vstv %s101
    %v103 = vadd.s32 %v100, %v102
    %vm104 = vcmp.lt.s32.totalorder %v103, 8
    %v105 = vsel %vm104, 0.0, -1e+30
    %v106 = vlaneseq
    %v107 = vshrl.u32 %v106, 7
    %v108 = vadd.s32 %v107, 8
    %s109 = smul.u32 0, 16
    %v110 = vstv %s109
    %v111 = vadd.s32 %v107, %v110
    %v112 = vadd.s32 %v108, %v110
    %vm113 = vcmp.lt.s32.totalorder %v111, 8
    %vm114 = vcmp.lt.s32.totalorder %v112, 8
    %v115 = vsel %vm113, 0.0, -1e+30
    %v116 = vsel %vm114, 0.0, -1e+30
    %v117 = vadd.f32 %v95, %v105
    %v118 = vadd.f32 %v97, %v105
    %v119 = vadd.f32 %v95, %v115
    %v120 = vadd.f32 %v97, %v116
    %vm121 = vcmask 130048
    %v122 = vsel %vm121, %v117, -inf
    %123 = vmax.xlane.f32.xlu0 %v122
    %v124 = vpop.xlane.xlu0 %123
    %v125 = vsel %vm121, %v118, -inf
    %126 = vmax.xlane.f32.xlu0 %v125
    %v127 = vpop.xlane.xlu0 %126
    %v128 = vld [vmem:[#allocation2] sm:$0xff]
    %v129 = vld [vmem:[#allocation2 + $0x8] sm:$0xff]
    %v130 = vmax.f32 %v128, %v124
    %v131 = vmax.f32 %v129, %v127
    %v132 = vld [vmem:[#allocation3] sm:$0xff]
    %v133 = vld [vmem:[#allocation3 + $0x8] sm:$0xff]
    %v134 = vsub.f32 %v128, %v130
    %v135 = vsub.f32 %v129, %v131
    %v136 = vmul.f32 %v134, 1.442695
    %v137 = vpow.pop %v136
    %v138 = vmul.f32 %v135, 1.442695
    %v139 = vpow.pop %v138
    %v140 = vmul.f32 %v132, %v137
    %v141 = vmul.f32 %v133, %v139
    %143 = vset.pattern.permute.xlu0 0
    %144 = vperm.xlu0 %143, %v130
    %v145 = vpop.permute.xlu0 %144
    %148 = vset.pattern.permute.xlu0 0
    %149 = vperm.xlu0 %148, %v131
    %v150 = vpop.permute.xlu0 %149
    %v152 = vsub.f32 %v117, %v145
    %v153 = vsub.f32 %v118, %v150
    %v154 = vmul.f32 %v152, 1.442695
    %v155 = vpow.pop %v154
    %v156 = vmul.f32 %v153, 1.442695
    %v157 = vpow.pop %v156
    %v158 = vsel %vm121, %v155, 0.0
    %159 = vadd.xlane.f32.xlu0 %v158
    %v160 = vpop.xlane.xlu0 %159
    %v161 = vsel %vm121, %v157, 0.0
    %162 = vadd.xlane.f32.xlu0 %v161
    %v163 = vpop.xlane.xlu0 %162
    %v164 = vadd.f32 %v140, %v160
    %v165 = vadd.f32 %v141, %v163
    %vm166 = vcmask 7168
    %167 = vst.msk [vmem:[#allocation3] sm:$0xff] %vm166, %v164
    %168 = vst.msk [vmem:[#allocation3 + $0x8] sm:$0xff] %vm166, %v165
    %169 = vst.msk [vmem:[#allocation2] sm:$0xff] %vm166, %v130
    %170 = vst.msk [vmem:[#allocation2 + $0x8] sm:$0xff] %vm166, %v131
    %v171 = vld [vmem:[#allocation4] sm:$0x1]
    %v172 = vld [vmem:[#allocation5] sm:$0x1]
    %v173 = vsel %vm121, %v119, -inf
    %v174 = vsel %vm121, %v120, -inf
    %v175 = vmax.f32 %v173, %v174
    %v176 = vrot.slane %v175, 4
    %v177 = vmax.f32 %v175, %v176
    %v178 = vrot.slane %v177, 2
    %v179 = vmax.f32 %v177, %v178
    %v180 = vrot.slane %v179, 1
    %v181 = vmax.f32 %v179, %v180
    %v182 = vmax.f32 %v171, %v181
    %v183 = vsub.f32 %v171, %v182
    %v184 = vmul.f32 %v183, 1.442695
    %v185 = vpow.pop %v184
    %v186 = vmul.f32 %v172, %v185
    %v188 = vperm.slane %v182, 0
    %v190 = vsub.f32 %v119, %v188
    %v191 = vsub.f32 %v120, %v188
    %v192 = vmul.f32 %v190, 1.442695
    %v193 = vpow.pop %v192
    %v194 = vmul.f32 %v191, 1.442695
    %v195 = vpow.pop %v194
    %v196 = vsel %vm121, %v193, 0.0
    %v197 = vsel %vm121, %v195, 0.0
    %v198 = vadd.f32 %v196, %v197
    %v199 = vrot.slane %v198, 4
    %v200 = vadd.f32 %v198, %v199
    %v201 = vrot.slane %v200, 2
    %v202 = vadd.f32 %v200, %v201
    %v203 = vrot.slane %v202, 1
    %v204 = vadd.f32 %v202, %v203
    %v205 = vadd.f32 %v186, %v204
    %vm206 = vcmask 122880
    %207 = vst.msk [vmem:[#allocation5] sm:$0x1] %vm206, %v205
    %208 = vst.msk [vmem:[#allocation4] sm:$0x1] %vm206, %v182
    %p209 = scmp.le.s32.totalorder %s101, %s109
    %s210 = sadd.s32 0, 1
    %s211 = smul.u32 %s210, 16
    %p212 = scmp.lt.s32.totalorder %s109, %s211
    %p213 = pnand %p209, %p212
    %p214 = pneg %p213
    // Predicated region
    $region30: #{tpu_custom_call.1} parent=1 // pred_check
      _
    $region31: #{tpu_custom_call.1} parent=1 // pred_check_branch
      %216 = sbr.rel (%p213) target = $region33
    $region32: #{tpu_custom_call.1} parent=1 // pred_region
      %vm217 = vcmp.eq.s32.totalorder %v111, %v103
      %vm218 = vcmp.eq.s32.totalorder %v112, %v103
      %v219 = vsel %vm217, %v95, 0.0
      %v220 = vsel %vm218, %v97, 0.0
      %v221 = vsel %vm121, %v219, 0.0
      %222 = vadd.xlane.f32.xlu0 %v221
      %v223 = vpop.xlane.xlu0 %222
      %v224 = vsel %vm121, %v220, 0.0
      %225 = vadd.xlane.f32.xlu0 %v224
      %v226 = vpop.xlane.xlu0 %225
      %v227 = vsel %vm113, %v223, 0.0
      %v228 = vsel %vm114, %v226, 0.0
      %v229 = vld [vmem:[#allocation8] sm:$0x1]
      %v230 = vadd.f32 %v227, %v228
      %v231 = vrot.slane %v230, 4
      %v232 = vadd.f32 %v230, %v231
      %v233 = vrot.slane %v232, 2
      %v234 = vadd.f32 %v232, %v233
      %v235 = vrot.slane %v234, 1
      %v236 = vadd.f32 %v234, %v235
      %v237 = vadd.f32 %v229, %v236
      %vm238 = vcmask 0
      %239 = vst.msk [vmem:[#allocation8] sm:$0x1] %vm238, %v237
    $region33: #{tpu_custom_call.1} parent=1 // pred_fallthru
      _
    // Predicated region
    $region34: #{tpu_custom_call.1} parent=1 // pred_check
      %p240 = pneg %p46
    $region35: #{tpu_custom_call.1} parent=1 // pred_check_branch
      %242 = sbr.rel (%p240) target = $region37
    $region36: #{tpu_custom_call.1} parent=1 // pred_region
      %v243 = vld [vmem:[#allocation2] sm:$0xff]
      %v244 = vld [vmem:[#allocation2 + $0x8] sm:$0xff]
      %v245 = vld [vmem:[#allocation3] sm:$0xff]
      %v246 = vld [vmem:[#allocation3 + $0x8] sm:$0xff]
      %v247 = vlog2.pop %v245
      %v248 = vmul.f32 %v247, 0.6931472
      %v249 = vlog2.pop %v246
      %v250 = vmul.f32 %v249, 0.6931472
      %v251 = vadd.f32 %v243, %v248
      %v252 = vadd.f32 %v244, %v250
      %v253 = vsel %vm113, %v251, 0.0
      %v254 = vsel %vm114, %v252, 0.0
      %v255 = vld [vmem:[#allocation6] sm:$0x1]
      %v256 = vsel %vm166, %v253, 0.0
      %v257 = vsel %vm166, %v254, 0.0
      %v258 = vadd.f32 %v256, %v257
      %v259 = vrot.slane %v258, 4
      %v260 = vadd.f32 %v258, %v259
      %v261 = vrot.slane %v260, 2
      %v262 = vadd.f32 %v260, %v261
      %v263 = vrot.slane %v262, 1
      %v264 = vadd.f32 %v262, %v263
      %v265 = vadd.f32 %v255, %v264
      %vm266 = vcmask 0
      %267 = vst.msk [vmem:[#allocation6] sm:$0x1] %vm266, %v265
    $region37: #{tpu_custom_call.1} parent=1 // pred_fallthru
      _
    // Predicated region
    $region38: #{tpu_custom_call.1} parent=1 // pred_check
      %p268 = pneg %p45
    $region39: #{tpu_custom_call.1} parent=1 // pred_check_branch
      %270 = sbr.rel (%p268) target = $region41
    $region40: #{tpu_custom_call.1} parent=1 // pred_region
      %v271 = vld [vmem:[#allocation4] sm:$0x1]
      %v272 = vld [vmem:[#allocation5] sm:$0x1]
      %v273 = vlog2.pop %v272
      %v274 = vmul.f32 %v273, 0.6931472
      %v275 = vadd.f32 %v271, %v274
      %v276 = vsel %vm104, %v275, 0.0
      %v277 = vld [vmem:[#allocation7] sm:$0x1]
      %v278 = vsel %vm206, %v276, 0.0
      %279 = vadd.xlane.f32.xlu0 %v278
      %v280 = vpop.xlane.xlu0 %279
      %v281 = vadd.f32 %v277, %v280
      %vm282 = vcmask 0
      %283 = vst.msk [vmem:[#allocation7] sm:$0x1] %vm282, %v281
    $region41: #{tpu_custom_call.1} parent=1 // pred_fallthru
      _
    // Predicated region
    $region42: #{tpu_custom_call.1} parent=1 // pred_check
      _
    $region43: #{tpu_custom_call.1} parent=1 // pred_check_branch
      %285 = sbr.rel (%p47) target = $region45
    $region44: #{tpu_custom_call.1} parent=1 // pred_region
      %v286 = vld [vmem:[#allocation6] sm:$0x1]
      %v287 = vld [vmem:[#allocation7] sm:$0x1]
      %v288 = vadd.f32 %v286, %v287
      %v289 = vld [vmem:[#allocation8] sm:$0x1]
      %v290 = vmul.f32 %v289, 2.0
      %v291 = vsub.f32 %v288, %v290
      %v292 = vmul.f32 %v291, 0.0625
      %vm293 = vcmask 0
      %294 = vst.msk [vmem:[#allocation14] sm:$0x1] %vm293, %v292
    $region45: #{tpu_custom_call.1} parent=1 // pred_fallthru
      _
    // Predicated region
    $region46: #{tpu_custom_call.1} parent=1 // pred_check
      _
    $region47: #{tpu_custom_call.1} parent=1 // pred_check_branch
      %296 = sbr.rel (0) target = $region49
    $region48: #{tpu_custom_call.1} parent=1 // pred_region
      %298 = vsyncadd [#allocation11], 0
      %s300 = sshll.u32 [#allocation14], 4
      %s301 = int_to_ptr.vmem [resolvable:$true] %s300
      %s302 = sshll.u32 %s2, 4
      %s303 = int_to_ptr.hbm [resolvable:$true] %s302
      %305 = dma.vmem_to_hbm [thread:$0]  %s301, 16, %s303, [#allocation11]
    $region49: #{tpu_custom_call.1} parent=1 // pred_fallthru
      _
    // Predicated region
    $region50: #{tpu_custom_call.1} parent=1 // pred_check
      _
    $region51: #{tpu_custom_call.1} parent=1 // pred_check_branch
      %307 = sbr.rel (0) target = $region53
    $region52: #{tpu_custom_call.1} parent=1 // pred_region
      %309 = dma.done [#allocation11], 16
    $region53: #{tpu_custom_call.1} parent=1 // pred_fallthru
      _
    %310 = vsyncpa [#allocation10], 1
    %311 = vsyncpa [#allocation13], 1
    %312 = vsyncpa [#allocation11], 1

</llo_original>
